<compile_context>
chip_gen: v6e
topology: v6e:2x2x1
jax: 0.10.0
libtpu: 0.0.40
codegen_flags: <defaults>
</compile_context>

<pallas_src>
import jax
import jax.numpy as jnp
from jax import lax
from jax.experimental import pallas as pl
from jax.experimental.pallas import tpu as pltpu


def mlp_kernel(x_ref, w1_ref, b1_ref, w2_ref, b2_ref, w3_ref, b3_ref, o_ref):
    x = x_ref[...]                       # (TB, 12)  float32, features last
    w1 = w1_ref[...]                     # (12, 12)  PyTorch (out, in) layout
    w2 = w2_ref[...]                     # (12, 12)
    w3 = w3_ref[...]                     # (1, 12)
    b1 = b1_ref[...]                     # (12, 1)   column biases
    b2 = b2_ref[...]                     # (12, 1)
    b3 = b3_ref[...]                     # (1, 1)

    # Layer 1: h[o, b] = sum_i W1[o, i] * x[b, i]  -> (12, TB), batch on lanes.
    h = lax.dot_general(w1, x, (((1,), (1,)), ((), ())),
                        preferred_element_type=jnp.float32)
    h = jnp.tanh(h + b1)

    # Layer 2: (12, 12) @ (12, TB) -> (12, TB)
    h = jnp.tanh(jnp.dot(w2, h, preferred_element_type=jnp.float32) + b2)

    # Output layer: (1, 12) @ (12, TB) -> (1, TB); sigmoid via tanh identity
    # (exact, and keeps the final nonlinearity on the otherwise idle EUP slot).
    z = jnp.dot(w3, h, preferred_element_type=jnp.float32) + b3
    o_ref[...] = (0.5 * (jnp.tanh(0.5 * z) + 1.0)).astype(o_ref.dtype)


def _choose_batch_tile(B, block_b):
    """Pick the batch tile.

    Multi-tile runs need tb % 128 == 0 (lane-dense (1, tb) output block) and
    tb % 8 == 0 (x sublanes); a single full block (tb == B) is always legal.
    Once B >= 256 we always emit >= 2 grid steps so v7x's two TensorCores both
    get work under dimension_semantics=("parallel",).
    """
    if B < 256:
        return B                              # one full block; overhead-dominated anyway
    n_tiles = max(2, pl.cdiv(B, block_b))     # >= 2 steps, each <= block_b rows
    tb = -(-B // n_tiles)                     # ceil(B / n_tiles)
    tb = ((tb + 127) // 128) * 128            # lane constraint for (1, tb) output block
    return min(tb, block_b)


def neural_network_forward(x, params, *, block_b=8192):
    """x: (B, 12) float32. params: PyTorch-layout (out, in) weights, 1-D biases."""
    B, F = x.shape
    assert F == 12
    w1, w2, w3 = params["w1"], params["w2"], params["w3"]
    # Accept PyTorch-style 1-D biases (or columns) and use them as column vectors.
    b1 = params["b1"].reshape(12, 1)
    b2 = params["b2"].reshape(12, 1)
    b3 = params["b3"].reshape(1, 1)

    tb = _choose_batch_tile(B, block_b)
    grid = (pl.cdiv(B, tb),)

    # Constant-index specs: weights/biases stay VMEM-resident across all steps.
    const = lambda shape: pl.BlockSpec(shape, lambda i: (0, 0))

    out_row = pl.pallas_call(
        mlp_kernel,
        out_shape=jax.ShapeDtypeStruct((1, B), jnp.float32),
        grid=grid,
        in_specs=[
            pl.BlockSpec((tb, 12), lambda i: (i, 0)),   # x: batch-tiled, double-buffered
            const((12, 12)), const((12, 1)),            # w1, b1
            const((12, 12)), const((12, 1)),            # w2, b2
            const((1, 12)), const((1, 1)),              # w3, b3
        ],
        out_specs=pl.BlockSpec((1, tb), lambda i: (0, i)),  # lane-dense output row
        compiler_params=pltpu.CompilerParams(
            dimension_semantics=("parallel",),
            # Explicit limit: v5e's scoped-VMEM default is 16 MiB; the padded
            # double-buffered x tile at tb=8192 needs ~11 MiB total.  32 MiB is
            # within every generation's budget (== v7x scoped default).
            vmem_limit_bytes=32 * 1024 * 1024),
    )(x, w1, b1, w2, b2, w3, b3)

    return out_row.reshape(B, 1)


def init_params(key):
    """PyTorch nn.Linear default init; weights in (out, in) layout, 1-D biases."""
    ks = jax.random.split(key, 6)

    def uniform(k, shape, fan_in):
        bound = 1.0 / jnp.sqrt(fan_in)
        return jax.random.uniform(k, shape, jnp.float32, -bound, bound)

    return {
        "w1": uniform(ks[0], (12, 12), 12.0),  # hidden1.weight
        "b1": uniform(ks[1], (12,), 12.0),     # hidden1.bias
        "w2": uniform(ks[2], (12, 12), 12.0),  # hidden2.weight
        "b2": uniform(ks[3], (12,), 12.0),     # hidden2.bias
        "w3": uniform(ks[4], (1, 12), 12.0),   # output.weight
        "b3": uniform(ks[5], (1,), 12.0),      # output.bias
    }


def reference_forward(x, p):
    h1 = jnp.tanh(x @ p["w1"].T + p["b1"])
    h2 = jnp.tanh(h1 @ p["w2"].T + p["b2"])
    return jax.nn.sigmoid(h2 @ p["w3"].T + p["b3"])


if __name__ == "__main__":
    key = jax.random.PRNGKey(0)
    k_x, k_p = jax.random.split(key)
    params = init_params(k_p)

    # 1) Small batch: single full block path.
    x_small = jax.random.normal(k_x, (8, 12), jnp.float32)
    out_small = jax.block_until_ready(neural_network_forward(x_small, params))
    ref_small = reference_forward(x_small, params)
    assert out_small.shape == (8, 1), out_small.shape
    assert jnp.allclose(out_small, ref_small, atol=2e-5, rtol=2e-5), (
        float(jnp.max(jnp.abs(out_small - ref_small))))

    # 2) Medium batch: exercises the >=2-step grid (v7x megacore path).
    x_med = jax.random.normal(k_x, (2048, 12), jnp.float32)
    out_med = jax.block_until_ready(neural_network_forward(x_med, params))
    ref_med = reference_forward(x_med, params)
    assert out_med.shape == (2048, 1), out_med.shape
    assert jnp.allclose(out_med, ref_med, atol=2e-5, rtol=2e-5), (
        float(jnp.max(jnp.abs(out_med - ref_med))))

    # 3) Ragged last block: B % tb != 0 (1000 rows, 256-row tiles -> 4 steps).
    x_rag = jax.random.normal(k_x, (1000, 12), jnp.float32)
    out_rag = jax.block_until_ready(
        neural_network_forward(x_rag, params, block_b=256))
    ref_rag = reference_forward(x_rag, params)
    assert out_rag.shape == (1000, 1), out_rag.shape
    assert jnp.allclose(out_rag, ref_rag, atol=2e-5, rtol=2e-5), (
        float(jnp.max(jnp.abs(out_rag - ref_rag))))

    print("KERNEL_OK")
</pallas_src>

<mosaic_0001>
module attributes {stable_mosaic.version = 11 : i64} {
  func.func @mlp_kernel(%arg0: i32, %arg1: memref<8x12xf32, #tpu.memory_space<vmem>>, %arg2: memref<12x12xf32, #tpu.memory_space<vmem>>, %arg3: memref<12x1xf32, #tpu.memory_space<vmem>>, %arg4: memref<12x12xf32, #tpu.memory_space<vmem>>, %arg5: memref<12x1xf32, #tpu.memory_space<vmem>>, %arg6: memref<1x12xf32, #tpu.memory_space<vmem>>, %arg7: memref<1x1xf32, #tpu.memory_space<vmem>>, %arg8: memref<1x8xf32, #tpu.memory_space<vmem>>) attributes {dimension_semantics = [#tpu.dimension_semantics<parallel>], iteration_bounds = array<i64: 1>, scalar_prefetch = 0 : i64, scratch_operands = 0 : i64, tpu.core_type = #tpu.core_type<tc>, window_params = [{transform_indices = @transform_0, window_bounds = array<i64: 8, 12>}, {pipeline_mode = #tpu.pipeline_mode<synchronous>, transform_indices = @transform_1, window_bounds = array<i64: 12, 12>}, {pipeline_mode = #tpu.pipeline_mode<synchronous>, transform_indices = @transform_2, window_bounds = array<i64: 12, 1>}, {pipeline_mode = #tpu.pipeline_mode<synchronous>, transform_indices = @transform_3, window_bounds = array<i64: 12, 12>}, {pipeline_mode = #tpu.pipeline_mode<synchronous>, transform_indices = @transform_4, window_bounds = array<i64: 12, 1>}, {pipeline_mode = #tpu.pipeline_mode<synchronous>, transform_indices = @transform_5, window_bounds = array<i64: 1, 12>}, {pipeline_mode = #tpu.pipeline_mode<synchronous>, transform_indices = @transform_6, window_bounds = array<i64: 1, 1>}, {transform_indices = @transform_7, window_bounds = array<i64: 1, 8>}]} {
    %c0 = arith.constant 0 : index
    %c0_0 = arith.constant 0 : index
    %0 = vector.load %arg1[%c0, %c0_0] : memref<8x12xf32, #tpu.memory_space<vmem>>, vector<8x12xf32>
    %c0_1 = arith.constant 0 : index
    %c0_2 = arith.constant 0 : index
    %1 = vector.load %arg2[%c0_1, %c0_2] : memref<12x12xf32, #tpu.memory_space<vmem>>, vector<12x12xf32>
    %c0_3 = arith.constant 0 : index
    %c0_4 = arith.constant 0 : index
    %2 = vector.load %arg4[%c0_3, %c0_4] : memref<12x12xf32, #tpu.memory_space<vmem>>, vector<12x12xf32>
    %c0_5 = arith.constant 0 : index
    %c0_6 = arith.constant 0 : index
    %3 = vector.load %arg6[%c0_5, %c0_6] : memref<1x12xf32, #tpu.memory_space<vmem>>, vector<1x12xf32>
    %c0_7 = arith.constant 0 : index
    %c0_8 = arith.constant 0 : index
    %4 = vector.load %arg3[%c0_7, %c0_8] : memref<12x1xf32, #tpu.memory_space<vmem>>, vector<12x1xf32>
    %c0_9 = arith.constant 0 : index
    %c0_10 = arith.constant 0 : index
    %5 = vector.load %arg5[%c0_9, %c0_10] : memref<12x1xf32, #tpu.memory_space<vmem>>, vector<12x1xf32>
    %c0_11 = arith.constant 0 : index
    %c0_12 = arith.constant 0 : index
    %6 = vector.load %arg7[%c0_11, %c0_12] : memref<1x1xf32, #tpu.memory_space<vmem>>, vector<1x1xf32>
    %cst = arith.constant dense<0.000000e+00> : vector<12x8xf32>
    %7 = tpu.matmul %1, %0, %cst {dimension_numbers = #tpu.dot_dimension_numbers<[1], [1], [0], [0], [0, 0, 1, 0], [], []>} : vector<12x12xf32>, vector<8x12xf32>, vector<12x8xf32> -> vector<12x8xf32>
    %8 = vector.broadcast %4 : vector<12x1xf32> to vector<12x8xf32>
    %9 = arith.addf %7, %8 : vector<12x8xf32>
    %10 = math.tanh %9 : vector<12x8xf32>
    %cst_13 = arith.constant dense<0.000000e+00> : vector<12x8xf32>
    %11 = tpu.matmul %2, %10, %cst_13 {dimension_numbers = #tpu.dot_dimension_numbers<[1], [0], [0], [1], [0, 0, 1, 1], [], []>} : vector<12x12xf32>, vector<12x8xf32>, vector<12x8xf32> -> vector<12x8xf32>
    %12 = vector.broadcast %5 : vector<12x1xf32> to vector<12x8xf32>
    %13 = arith.addf %11, %12 : vector<12x8xf32>
    %14 = math.tanh %13 : vector<12x8xf32>
    %cst_14 = arith.constant dense<0.000000e+00> : vector<1x8xf32>
    %15 = tpu.matmul %3, %14, %cst_14 {dimension_numbers = #tpu.dot_dimension_numbers<[1], [0], [0], [1], [0, 0, 1, 1], [], []>} : vector<1x12xf32>, vector<12x8xf32>, vector<1x8xf32> -> vector<1x8xf32>
    %16 = vector.broadcast %6 : vector<1x1xf32> to vector<1x8xf32>
    %17 = arith.addf %15, %16 : vector<1x8xf32>
    %cst_15 = arith.constant 5.000000e-01 : f32
    %18 = vector.broadcast %cst_15 : f32 to vector<1x8xf32>
    %19 = arith.mulf %18, %17 : vector<1x8xf32>
    %20 = math.tanh %19 : vector<1x8xf32>
    %cst_16 = arith.constant 1.000000e+00 : f32
    %21 = vector.broadcast %cst_16 : f32 to vector<1x8xf32>
    %22 = arith.addf %20, %21 : vector<1x8xf32>
    %cst_17 = arith.constant 5.000000e-01 : f32
    %23 = vector.broadcast %cst_17 : f32 to vector<1x8xf32>
    %24 = arith.mulf %23, %22 : vector<1x8xf32>
    %c0_18 = arith.constant 0 : index
    %c0_19 = arith.constant 0 : index
    %25 = vector.load %arg8[%c0_18, %c0_19] : memref<1x8xf32, #tpu.memory_space<vmem>>, vector<1x8xf32>
    tpu.vector_store %arg8[%c0_18, %c0_19], %24 {strides = array<i32>} : memref<1x8xf32, #tpu.memory_space<vmem>>, vector<1x8xf32>,
    return
  }
  func.func @transform_0(%arg0: i32) -> (i32, i32) {
    %c0_i32 = arith.constant 0 : i32
    %c0_i32_0 = arith.constant 0 : i32
    return %arg0, %c0_i32 : i32, i32
  }
  func.func @transform_1(%arg0: i32) -> (i32, i32) {
    %c0_i32 = arith.constant 0 : i32
    %c0_i32_0 = arith.constant 0 : i32
    %c0_i32_1 = arith.constant 0 : i32
    return %c0_i32, %c0_i32_0 : i32, i32
  }
  func.func @transform_2(%arg0: i32) -> (i32, i32) {
    %c0_i32 = arith.constant 0 : i32
    %c0_i32_0 = arith.constant 0 : i32
    %c0_i32_1 = arith.constant 0 : i32
    return %c0_i32, %c0_i32_0 : i32, i32
  }
  func.func @transform_3(%arg0: i32) -> (i32, i32) {
    %c0_i32 = arith.constant 0 : i32
    %c0_i32_0 = arith.constant 0 : i32
    %c0_i32_1 = arith.constant 0 : i32
    return %c0_i32, %c0_i32_0 : i32, i32
  }
  func.func @transform_4(%arg0: i32) -> (i32, i32) {
    %c0_i32 = arith.constant 0 : i32
    %c0_i32_0 = arith.constant 0 : i32
    %c0_i32_1 = arith.constant 0 : i32
    return %c0_i32, %c0_i32_0 : i32, i32
  }
  func.func @transform_5(%arg0: i32) -> (i32, i32) {
    %c0_i32 = arith.constant 0 : i32
    %c0_i32_0 = arith.constant 0 : i32
    %c0_i32_1 = arith.constant 0 : i32
    return %c0_i32, %c0_i32_0 : i32, i32
  }
  func.func @transform_6(%arg0: i32) -> (i32, i32) {
    %c0_i32 = arith.constant 0 : i32
    %c0_i32_0 = arith.constant 0 : i32
    %c0_i32_1 = arith.constant 0 : i32
    return %c0_i32, %c0_i32_0 : i32, i32
  }
  func.func @transform_7(%arg0: i32) -> (i32, i32) {
    %c0_i32 = arith.constant 0 : i32
    %c0_i32_0 = arith.constant 0 : i32
    return %c0_i32, %arg0 : i32, i32
  }
}

</mosaic_0001>

<llo_original>
// kernel: tpu_custom_call.1
$region0: #{tpu_custom_call.1}
  #allocation0 [shape = 'u32[]', space=smem, size = 0x4, offset = 0x4, fixed_abs, tag = 'smem constant byte address 0x4 - core index']
  #allocation1 [shape = 'u32[144,128]{1,0:T(1,128)}', space=vmem, size = 0x12000, scoped, tag = 'internal scratch']
  #allocation2 [shape = 'f32[1,1]{1,0:T(1,128)S(1)}', space=vmem, size = 0x200, scoped, tag = 'scoped memory for tpu_custom_call.1']
  %s0 = inlined_call_operand.hbm [shape: f32[8,12], index: 0, kind: input, shape index: {}]
  %s1 = inlined_call_operand.vmem [shape: f32[12,12], index: 1, kind: input, shape index: {}]
  %s2 = inlined_call_operand.vmem [shape: f32[12,1], index: 2, kind: input, shape index: {}]
  %s3 = inlined_call_operand.vmem [shape: f32[12,12], index: 3, kind: input, shape index: {}]
  %s4 = inlined_call_operand.vmem [shape: f32[12,1], index: 4, kind: input, shape index: {}]
  %s5 = inlined_call_operand.vmem [shape: f32[1,12], index: 5, kind: input, shape index: {}]
  %s6 = inlined_call_operand.<no memory space> [shape: f32[1,1], index: 6, kind: input, shape index: {}]
  %s7 = inlined_call_operand.hbm [shape: f32[1,8], index: 7, kind: output, shape index: {}]
  %s8 = sld [smem:[#allocation0]]
  $region42: #{tpu_custom_call.1} parent=0
    _
  %s10 = ssub.s32 1, %s8
  %s11 = scalar_select 0, %s10, %s8
  %v12 = vstv %s6
  %13 = vst [vmem:[#allocation2] sm:$0x1] %v12
  $region1: #{tpu_custom_call.1} parent=0
    #allocation3 [shape = 'u8[4096]{0}', space=vmem, size = 0x1000, scoped, tag = 'input window, operand 0, single buffered']
    #allocation4 [shape = 's32[1]{0}', space=sflag, size = 0x4, scoped, tag = 'scoped memory for tpu_custom_call.1']
    #allocation5 [shape = 's32[1]{0}', space=sflag, size = 0x4, scoped, tag = 'scoped memory for tpu_custom_call.1']
    #allocation6 [shape = 'u8[512]{0}', space=vmem, size = 0x400, scoped, tag = 'output window, operand 0, single buffered']
    %14 = vsyncpa [#allocation4], 0
    %15 = vsyncpa [#allocation5], 0
    // Predicated region
    $region2: #{tpu_custom_call.1} parent=1 // pred_check
      _
    $region3: #{tpu_custom_call.1} parent=1 // pred_check_branch
      %17 = sbr.rel (0) target = $region5
    $region4: #{tpu_custom_call.1} parent=1 // pred_region
      %s19 = ssub.s32 128, 128
      %20 = vsyncadd [#allocation4], %s19
      %s22 = sshll.u32 [#allocation3], 4
      %s23 = int_to_ptr.vmem [resolvable:$true] %s22
      %25 = dma.hbm_to_vmem [thread:$0]  %s0, 128, %s23, [#allocation4]
    $region5: #{tpu_custom_call.1} parent=1 // pred_fallthru
      _
    // Predicated region
    $region6: #{tpu_custom_call.1} parent=1 // pred_check
      _
    $region7: #{tpu_custom_call.1} parent=1 // pred_check_branch
      %27 = sbr.rel (0) target = $region9
    $region8: #{tpu_custom_call.1} parent=1 // pred_region
      _
    $region9: #{tpu_custom_call.1} parent=1 // pred_fallthru
      _
    // Predicated region
    $region10: #{tpu_custom_call.1} parent=1 // pred_check
      _
    $region11: #{tpu_custom_call.1} parent=1 // pred_check_branch
      %29 = sbr.rel (0) target = $region13
    $region12: #{tpu_custom_call.1} parent=1 // pred_region
      _
    $region13: #{tpu_custom_call.1} parent=1 // pred_fallthru
      _
    // Predicated region
    $region14: #{tpu_custom_call.1} parent=1 // pred_check
      _
    $region15: #{tpu_custom_call.1} parent=1 // pred_check_branch
      %31 = sbr.rel (0) target = $region17
    $region16: #{tpu_custom_call.1} parent=1 // pred_region
      _
    $region17: #{tpu_custom_call.1} parent=1 // pred_fallthru
      _
    // Predicated region
    $region18: #{tpu_custom_call.1} parent=1 // pred_check
      _
    $region19: #{tpu_custom_call.1} parent=1 // pred_check_branch
      %33 = sbr.rel (0) target = $region21
    $region20: #{tpu_custom_call.1} parent=1 // pred_region
      _
    $region21: #{tpu_custom_call.1} parent=1 // pred_fallthru
      _
    // Predicated region
    $region22: #{tpu_custom_call.1} parent=1 // pred_check
      _
    $region23: #{tpu_custom_call.1} parent=1 // pred_check_branch
      %35 = sbr.rel (0) target = $region25
    $region24: #{tpu_custom_call.1} parent=1 // pred_region
      _
    $region25: #{tpu_custom_call.1} parent=1 // pred_fallthru
      _
    // Predicated region
    $region26: #{tpu_custom_call.1} parent=1 // pred_check
      _
    $region27: #{tpu_custom_call.1} parent=1 // pred_check_branch
      %37 = sbr.rel (0) target = $region29
    $region28: #{tpu_custom_call.1} parent=1 // pred_region
      _
    $region29: #{tpu_custom_call.1} parent=1 // pred_fallthru
      _
    // Predicated region
    $region30: #{tpu_custom_call.1} parent=1 // pred_check
      _
    $region31: #{tpu_custom_call.1} parent=1 // pred_check_branch
      %39 = sbr.rel (0) target = $region33
    $region32: #{tpu_custom_call.1} parent=1 // pred_region
      %40 = dma.done [#allocation4], 128
    $region33: #{tpu_custom_call.1} parent=1 // pred_fallthru
      _
    %v41 = vld [vmem:[#allocation3] sm:$0xff]
    %v42 = vld [vmem:[%s1] sm:$0xff]
    %v43 = vld [vmem:[%s1 + $0x8] sm:$0xf]
    %v44 = vld [vmem:[%s3] sm:$0xff]
    %v45 = vld [vmem:[%s3 + $0x8] sm:$0xf]
    %v46 = vld [vmem:[%s5] sm:$0x1]
    %v47 = vld [vmem:[%s2] sm:$0xff]
    %v48 = vld [vmem:[%s2 + $0x8] sm:$0xf]
    %v49 = vld [vmem:[%s4] sm:$0xff]
    %v50 = vld [vmem:[%s4 + $0x8] sm:$0xf]
    %v51 = vld [vmem:[#allocation2] sm:$0x1]
    %53 = vset.pattern.permute.xlu0 0
    %54 = vperm.xlu0 %53, %v47
    %v55 = vpop.permute.xlu0 %54
    %58 = vset.pattern.permute.xlu0 0
    %59 = vperm.xlu0 %58, %v48
    %v60 = vpop.permute.xlu0 %59
    %vm62 = vcmask 97280
    %v64 = vsel %vm62, %v42, 0
    %v67 = vsel %vm62, %v43, 0
    %v70 = vsel %vm62, %v41, 0
    %72 = vmatprep.subr.mxu0 0.0
    %73 = vmatpush1.xpose.msra.mxu0 0.0
    %74 = vmatprep.subr.mxu0 0.0
    %75 = vmatpush1.xpose.msra.mxu0 0.0
    %76 = vmatprep.subr.mxu0 0.0
    %77 = vmatpush1.xpose.msra.mxu0 0.0
    %78 = vmatprep.subr.mxu0 0.0
    %79 = vmatpush1.xpose.msra.mxu0 0.0
    %80 = vmatprep.subr.mxu0 0.0
    %81 = vmatpush1.xpose.msra.mxu0 0.0
    %82 = vmatprep.subr.mxu0 0.0
    %83 = vmatpush1.xpose.msra.mxu0 0.0
    %84 = vmatprep.subr.mxu0 0.0
    %85 = vmatpush1.xpose.msra.mxu0 0.0
    %86 = vmatprep.subr.mxu0 0.0
    %87 = vmatpush1.xpose.msra.mxu0 0.0
    %88 = vmatprep.subr.mxu0 0.0
    %89 = vmatpush1.xpose.msra.mxu0 0.0
    %90 = vmatprep.subr.mxu0 0.0
    %91 = vmatpush1.xpose.msra.mxu0 0.0
    %92 = vmatprep.subr.mxu0 0.0
    %93 = vmatpush1.xpose.msra.mxu0 0.0
    %94 = vmatprep.subr.mxu0 0.0
    %95 = vmatpush1.xpose.msra.mxu0 0.0
    %96 = vmatprep.subr.mxu0 0.0
    %97 = vmatpush1.xpose.msra.mxu0 0.0
    %98 = vmatprep.subr.mxu0 0.0
    %99 = vmatpush1.xpose.msra.mxu0 0.0
    %100 = vmatprep.subr.mxu0 0.0
    %101 = vmatpush1.xpose.msra.mxu0 0.0
    %102 = vmatprep.subr.mxu0 0.0
    %103 = vmatpush1.xpose.msra.mxu0 %v70
    %104 = vmatprep.subr.mxu0 0.0
    %105 = vmatpush2.xpose.msra.mxu0 0.0
    %106 = vmatprep.subr.mxu0 0.0
    %107 = vmatpush2.xpose.msra.mxu0 0.0
    %108 = vmatprep.subr.mxu0 0.0
    %109 = vmatpush2.xpose.msra.mxu0 0.0
    %110 = vmatprep.subr.mxu0 0.0
    %111 = vmatpush2.xpose.msra.mxu0 0.0
    %112 = vmatprep.subr.mxu0 0.0
    %113 = vmatpush2.xpose.msra.mxu0 0.0
    %114 = vmatprep.subr.mxu0 0.0
    %115 = vmatpush2.xpose.msra.mxu0 0.0
    %116 = vmatprep.subr.mxu0 0.0
    %117 = vmatpush2.xpose.msra.mxu0 0.0
    %118 = vmatprep.subr.mxu0 0.0
    %119 = vmatpush2.xpose.msra.mxu0 0.0
    %120 = vmatprep.subr.mxu0 0.0
    %121 = vmatpush2.xpose.msra.mxu0 0.0
    %122 = vmatprep.subr.mxu0 0.0
    %123 = vmatpush2.xpose.msra.mxu0 0.0
    %124 = vmatprep.subr.mxu0 0.0
    %125 = vmatpush2.xpose.msra.mxu0 0.0
    %126 = vmatprep.subr.mxu0 0.0
    %127 = vmatpush2.xpose.msra.mxu0 0.0
    %128 = vmatprep.subr.mxu0 0.0
    %129 = vmatpush2.xpose.msra.mxu0 0.0
    %130 = vmatprep.subr.mxu0 0.0
    %131 = vmatpush2.xpose.msra.mxu0 0.0
    %132 = vmatprep.subr.mxu0 0.0
    %133 = vmatpush2.xpose.msra.mxu0 0.0
    %134 = vmatprep.subr.mxu0 0.0
    %135 = vmatpush2.xpose.msra.mxu0 0.0
    %136 = vmatprep.mubr.f32.mxu0 0.0
    %137 = vmatmul.mubr.f32.gmra.mxu0 %v64
    %v138 = vpop.f32.mrf.mxu0
    %v139 = vadd.f32 %v55, %v138
    %v140 = vpop.f32.mrf.mxu0
    %141 = vmatprep.mubr.f32.mxu0 0.0
    %142 = vmatmul.mubr.f32.gmra.mxu0 %v67
    %v143 = vpop.f32.mrf.mxu0
    %v144 = vadd.f32 %v60, %v143
    %v145 = vpop.f32.mrf.mxu0
    %146 = vdwg.mxu0
    %v147 = vtanh.pop %v139
    %v148 = vtanh.pop %v144
    %150 = vset.pattern.permute.xlu0 0
    %151 = vperm.xlu0 %150, %v49
    %v152 = vpop.permute.xlu0 %151
    %155 = vset.pattern.permute.xlu0 0
    %156 = vperm.xlu0 %155, %v50
    %v157 = vpop.permute.xlu0 %156
    %v160 = vsel %vm62, %v44, 0
    %v163 = vsel %vm62, %v45, 0
    %vm165 = vcmask 1043456
    %v167 = vsel %vm165, %v148, 0
    %169 = vmatprep.subr.mxu0 0.0
    %170 = vmatpush1.msra.mxu0 0.0
    %171 = vmatprep.subr.mxu0 0.0
    %172 = vmatpush1.msra.mxu0 0.0
    %173 = vmatprep.subr.mxu0 0.0
    %174 = vmatpush1.msra.mxu0 0.0
    %175 = vmatprep.subr.mxu0 0.0
    %176 = vmatpush1.msra.mxu0 0.0
    %177 = vmatprep.subr.mxu0 0.0
    %178 = vmatpush1.msra.mxu0 0.0
    %179 = vmatprep.subr.mxu0 0.0
    %180 = vmatpush1.msra.mxu0 0.0
    %181 = vmatprep.subr.mxu0 0.0
    %182 = vmatpush1.msra.mxu0 0.0
    %183 = vmatprep.subr.mxu0 0.0
    %184 = vmatpush1.msra.mxu0 0.0
    %185 = vmatprep.subr.mxu0 0.0
    %186 = vmatpush1.msra.mxu0 0.0
    %187 = vmatprep.subr.mxu0 0.0
    %188 = vmatpush1.msra.mxu0 0.0
    %189 = vmatprep.subr.mxu0 0.0
    %190 = vmatpush1.msra.mxu0 0.0
    %191 = vmatprep.subr.mxu0 0.0
    %192 = vmatpush1.msra.mxu0 0.0
    %193 = vmatprep.subr.mxu0 0.0
    %194 = vmatpush1.msra.mxu0 0.0
    %195 = vmatprep.subr.mxu0 0.0
    %196 = vmatpush1.msra.mxu0 0.0
    %197 = vmatprep.subr.mxu0 0.0
    %198 = vmatpush1.msra.mxu0 %v167
    %199 = vmatprep.subr.mxu0 0.0
    %200 = vmatpush1.msra.mxu0 %v147
    %201 = vmatprep.subr.mxu0 0.0
    %202 = vmatpush2.msra.mxu0 0.0
    %203 = vmatprep.subr.mxu0 0.0
    %204 = vmatpush2.msra.mxu0 0.0
    %205 = vmatprep.subr.mxu0 0.0
    %206 = vmatpush2.msra.mxu0 0.0
    %207 = vmatprep.subr.mxu0 0.0
    %208 = vmatpush2.msra.mxu0 0.0
    %209 = vmatprep.subr.mxu0 0.0
    %210 = vmatpush2.msra.mxu0 0.0
    %211 = vmatprep.subr.mxu0 0.0
    %212 = vmatpush2.msra.mxu0 0.0
    %213 = vmatprep.subr.mxu0 0.0
    %214 = vmatpush2.msra.mxu0 0.0
    %215 = vmatprep.subr.mxu0 0.0
    %216 = vmatpush2.msra.mxu0 0.0
    %217 = vmatprep.subr.mxu0 0.0
    %218 = vmatpush2.msra.mxu0 0.0
    %219 = vmatprep.subr.mxu0 0.0
    %220 = vmatpush2.msra.mxu0 0.0
    %221 = vmatprep.subr.mxu0 0.0
    %222 = vmatpush2.msra.mxu0 0.0
    %223 = vmatprep.subr.mxu0 0.0
    %224 = vmatpush2.msra.mxu0 0.0
    %225 = vmatprep.subr.mxu0 0.0
    %226 = vmatpush2.msra.mxu0 0.0
    %227 = vmatprep.subr.mxu0 0.0
    %228 = vmatpush2.msra.mxu0 0.0
    %229 = vmatprep.subr.mxu0 0.0
    %230 = vmatpush2.msra.mxu0 0.0
    %231 = vmatprep.subr.mxu0 0.0
    %232 = vmatpush2.msra.mxu0 0.0
    %233 = vmatprep.mubr.f32.mxu0 0.0
    %234 = vmatmul.mubr.f32.gmra.mxu0 %v160
    %v235 = vpop.f32.mrf.mxu0
    %v236 = vadd.f32 %v152, %v235
    %v237 = vpop.f32.mrf.mxu0
    %238 = vmatprep.mubr.f32.mxu0 0.0
    %239 = vmatmul.mubr.f32.gmra.mxu0 %v163
    %v240 = vpop.f32.mrf.mxu0
    %v241 = vadd.f32 %v157, %v240
    %v242 = vpop.f32.mrf.mxu0
    %243 = vdwg.mxu0
    %v244 = vtanh.pop %v236
    %v245 = vtanh.pop %v241
    %247 = vset.pattern.permute.xlu0 0
    %248 = vperm.xlu0 %247, %v51
    %v249 = vpop.permute.xlu0 %248
    %v251 = vlaneseq
    %v252 = vshrl.u32 %v251, 7
    %v253 = vsub.s32 0, %v252
    %v254 = vrot.slane %v249, %v253
    %v256 = vsel %vm62, %v46, 0
    %v259 = vsel %vm165, %v245, 0
    %261 = vmatprep.subr.mxu0 0.0
    %262 = vmatpush1.msra.mxu0 0.0
    %263 = vmatprep.subr.mxu0 0.0
    %264 = vmatpush1.msra.mxu0 0.0
    %265 = vmatprep.subr.mxu0 0.0
    %266 = vmatpush1.msra.mxu0 0.0
    %267 = vmatprep.subr.mxu0 0.0
    %268 = vmatpush1.msra.mxu0 0.0
    %269 = vmatprep.subr.mxu0 0.0
    %270 = vmatpush1.msra.mxu0 0.0
    %271 = vmatprep.subr.mxu0 0.0
    %272 = vmatpush1.msra.mxu0 0.0
    %273 = vmatprep.subr.mxu0 0.0
    %274 = vmatpush1.msra.mxu0 0.0
    %275 = vmatprep.subr.mxu0 0.0
    %276 = vmatpush1.msra.mxu0 0.0
    %277 = vmatprep.subr.mxu0 0.0
    %278 = vmatpush1.msra.mxu0 0.0
    %279 = vmatprep.subr.mxu0 0.0
    %280 = vmatpush1.msra.mxu0 0.0
    %281 = vmatprep.subr.mxu0 0.0
    %282 = vmatpush1.msra.mxu0 0.0
    %283 = vmatprep.subr.mxu0 0.0
    %284 = vmatpush1.msra.mxu0 0.0
    %285 = vmatprep.subr.mxu0 0.0
    %286 = vmatpush1.msra.mxu0 0.0
    %287 = vmatprep.subr.mxu0 0.0
    %288 = vmatpush1.msra.mxu0 0.0
    %289 = vmatprep.subr.mxu0 0.0
    %290 = vmatpush1.msra.mxu0 %v259
    %291 = vmatprep.subr.mxu0 0.0
    %292 = vmatpush1.msra.mxu0 %v244
    %293 = vmatprep.subr.mxu0 0.0
    %294 = vmatpush2.msra.mxu0 0.0
    %295 = vmatprep.subr.mxu0 0.0
    %296 = vmatpush2.msra.mxu0 0.0
    %297 = vmatprep.subr.mxu0 0.0
    %298 = vmatpush2.msra.mxu0 0.0
    %299 = vmatprep.subr.mxu0 0.0
    %300 = vmatpush2.msra.mxu0 0.0
    %301 = vmatprep.subr.mxu0 0.0
    %302 = vmatpush2.msra.mxu0 0.0
    %303 = vmatprep.subr.mxu0 0.0
    %304 = vmatpush2.msra.mxu0 0.0
    %305 = vmatprep.subr.mxu0 0.0
    %306 = vmatpush2.msra.mxu0 0.0
    %307 = vmatprep.subr.mxu0 0.0
    %308 = vmatpush2.msra.mxu0 0.0
    %309 = vmatprep.subr.mxu0 0.0
    %310 = vmatpush2.msra.mxu0 0.0
    %311 = vmatprep.subr.mxu0 0.0
    %312 = vmatpush2.msra.mxu0 0.0
    %313 = vmatprep.subr.mxu0 0.0
    %314 = vmatpush2.msra.mxu0 0.0
    %315 = vmatprep.subr.mxu0 0.0
    %316 = vmatpush2.msra.mxu0 0.0
    %317 = vmatprep.subr.mxu0 0.0
    %318 = vmatpush2.msra.mxu0 0.0
    %319 = vmatprep.subr.mxu0 0.0
    %320 = vmatpush2.msra.mxu0 0.0
    %321 = vmatprep.subr.mxu0 0.0
    %322 = vmatpush2.msra.mxu0 0.0
    %323 = vmatprep.subr.mxu0 0.0
    %324 = vmatpush2.msra.mxu0 0.0
    %325 = vmatprep.mubr.f32.mxu0 0.0
    %326 = vmatmul.mubr.f32.gmra.mxu0 %v256
    %v327 = vpop.f32.mrf.mxu0
    %v328 = vadd.f32 %v254, %v327
    %v329 = vpop.f32.mrf.mxu0
    %330 = vdwg.mxu0
    %v331 = vmul.f32 %v328, 0.5
    %v332 = vtanh.pop %v331
    %v333 = vadd.f32 %v332, 1.0
    %v334 = vmul.f32 %v333, 0.5
    %vm335 = vcmask 57344
    %336 = vst.msk [vmem:[#allocation6] sm:$0x1] %vm335, %v334
    // Predicated region
    $region34: #{tpu_custom_call.1} parent=1 // pred_check
      _
    $region35: #{tpu_custom_call.1} parent=1 // pred_check_branch
      %338 = sbr.rel (0) target = $region37
    $region36: #{tpu_custom_call.1} parent=1 // pred_region
      %s340 = ssub.s32 16, 16
      %341 = vsyncadd [#allocation5], %s340
      %s343 = sshll.u32 [#allocation6], 4
      %s344 = int_to_ptr.vmem [resolvable:$true] %s343
      %346 = dma.vmem_to_hbm [thread:$0]  %s344, 16, %s7, [#allocation5]
    $region37: #{tpu_custom_call.1} parent=1 // pred_fallthru
      _
    // Predicated region
    $region38: #{tpu_custom_call.1} parent=1 // pred_check
      _
    $region39: #{tpu_custom_call.1} parent=1 // pred_check_branch
      %348 = sbr.rel (0) target = $region41
    $region40: #{tpu_custom_call.1} parent=1 // pred_region
      %349 = dma.done [#allocation5], 16
    $region41: #{tpu_custom_call.1} parent=1 // pred_fallthru
      _
    %350 = vsyncpa [#allocation4], 1
    %351 = vsyncpa [#allocation5], 1

</llo_original>
